<compile_context>
chip_gen: v6e
topology: v6e:2x2x1
jax: 0.10.0
libtpu: 0.0.40
codegen_flags: <defaults>
</compile_context>

<pallas_src>
import jax
import jax.numpy as jnp
from jax.experimental import pallas as pl
from jax.experimental.pallas import tpu as pltpu


# ---------------------------------------------------------------------------
# Fused kernel: one grid step = TB batch rows, everything lane-dense in TB*E.
#   x      : (1, TB*E) f32    (block of the (B//TB, TB*E) wrapper view)
#   tok    : (V, E)   bf16    tok_emb
#   tokT   : (E, V)   bf16    tok_emb^T (wrapper layout plumbing)
#   wac    : (2, E)   f32     rows [wa; wc]  (scale folded in, weights only)
#   wv     : (H, E)   bf16    value weight
#   consts : (3,)     f32     [ca, cc, proj_bias]   (SMEM)
#   wp     : (H, 1)   f32     proj weight column
#   out    : (1, TB*E) f32
#   wei_ref: (V, TB*E) f32    VMEM scratch band for the softmax weights
# ---------------------------------------------------------------------------
def head_fused_kernel(x_ref, tok_ref, tokT_ref, wac_ref, wv_ref, consts_ref,
                      wp_ref, out_ref, wei_ref):
    V, E = tok_ref.shape
    TBE = x_ref.shape[-1]
    TB = TBE // E

    ca = consts_ref[0]
    cc = consts_ref[1]
    bp = consts_ref[2]

    # --- tok_emb-only precompute (recomputed per step: trivial cost, and safe
    # on v7x where each TensorCore has its own VMEM scratch). -----------------
    tok = tok_ref[...].astype(jnp.float32)                              # (V, E)
    # a[v] = scale*(k[v]·wq) = tok[v]·wa + ca ; c[v] = tok[v]·wc + cc
    a = jnp.sum(tok * wac_ref[0:1, :], axis=-1, keepdims=True) + ca     # (V, 1)
    c = jnp.sum(tok * wac_ref[1:2, :], axis=-1, keepdims=True) + cc     # (V, 1)

    # value^T = tanh(Wv @ tok_emb^T): (H, V) lane-dense in V; bf16 MXU, f32 acc
    vt = jnp.tanh(jnp.dot(wv_ref[...], tokT_ref[...],
                          preferred_element_type=jnp.float32))          # (H, V)

    # --- attention weights: wei[v, b*E+e] = softmax_e(a[v]*x[b,e] + c[v]) ----
    # Softmax runs over E (dim=-2 of the original (B,E,V) layout).  Stats are
    # computed per batch segment on (V, E) slices; results are assembled into
    # the lane-dense (V, TB*E) scratch band (static unrolled loop, TB is tiny).
    for b in range(TB):
        xb = x_ref[:, b * E:(b + 1) * E]                                 # (1, E)
        logits = a * xb + c                                              # (V, E)
        m = jnp.max(logits, axis=-1, keepdims=True)                      # (V, 1)
        p = jnp.exp(logits - m)                                          # (V, E)
        denom = jnp.sum(p, axis=-1, keepdims=True)                       # (V, 1)
        wei_ref[:, b * E:(b + 1) * E] = p * pl.reciprocal(denom, approx=True)

    # out^T = v^T @ wei : (H, TB*E) lane-dense; single MXU matmul, N = TB*E
    o_t = jnp.dot(vt.astype(jnp.bfloat16),
                  wei_ref[...].astype(jnp.bfloat16),
                  preferred_element_type=jnp.float32)                    # (H, TB*E)
    t = jnp.tanh(o_t)                                                    # (H, TB*E)

    # proj Linear(H, 1) == sublane-weighted reduction -> (1, TB*E) lane-dense
    out_ref[...] = (jnp.sum(t * wp_ref[...], axis=0, keepdims=True)
                    + bp).astype(out_ref.dtype)


# ---------------------------------------------------------------------------
# Wrapper
# ---------------------------------------------------------------------------
def head_forward(x, tok_emb, p):
    B, E = x.shape
    V = tok_emb.shape[0]
    H = p['wk'].shape[0]
    scale = float(H) ** -0.5

    # Batch blocking: TB rows per grid step so the lane dim is TB*E (target
    # >= 256 to fill the MXU N dimension and get unmasked output stores; falls
    # back to TB = B for small batches like the demo below).
    TB = B
    for d in range(1, B + 1):
        if B % d == 0 and d * E >= 256:
            TB = d
            break
    NB = B // TB
    TBE = TB * E

    # Weight-only packing (no activation math hoisted into the wrapper):
    #   wei[b,e,v] = x[b,e]*a[v] + c[v],  a = tok_emb@wa + ca,  c = tok_emb@wc + cc
    wa = scale * (p['wq'] @ p['wk'])                                     # (E,)
    wc = scale * (p['bq'] @ p['wk'])                                     # (E,)
    ca = scale * jnp.dot(p['wq'], p['bk'])                               # scalar
    cc = scale * jnp.dot(p['bq'], p['bk'])                               # scalar
    wac = jnp.stack([wa, wc], axis=0).astype(jnp.float32)                # (2, E)
    consts = jnp.stack([ca, cc, p['bproj'][0]]).astype(jnp.float32)      # (3,)

    tok_bf = tok_emb.astype(jnp.bfloat16)                                # (V, E)
    tokT_bf = tok_bf.T                                                   # (E, V)
    wv_bf = p['wv'].astype(jnp.bfloat16)                                 # (H, E)
    wp_col = p['wproj'].reshape(H, 1).astype(jnp.float32)                # (H, 1)

    x_flat = x.reshape(NB, TBE)

    out_flat = pl.pallas_call(
        head_fused_kernel,
        out_shape=jax.ShapeDtypeStruct((NB, TBE), x.dtype),
        grid=(NB,),
        in_specs=[
            pl.BlockSpec((1, TBE), lambda i: (i, 0)),            # x block (lane-dense)
            pl.BlockSpec((V, E), lambda i: (0, 0)),              # tok_emb bf16
            pl.BlockSpec((E, V), lambda i: (0, 0)),              # tok_emb^T bf16
            pl.BlockSpec((2, E), lambda i: (0, 0)),              # [wa; wc]
            pl.BlockSpec((H, E), lambda i: (0, 0)),              # Wv bf16
            pl.BlockSpec(memory_space=pltpu.MemorySpace.SMEM),   # [ca, cc, bp]
            pl.BlockSpec((H, 1), lambda i: (0, 0)),              # proj weight column
        ],
        out_specs=pl.BlockSpec((1, TBE), lambda i: (i, 0)),
        scratch_shapes=[pltpu.VMEM((V, TBE), jnp.float32)],
        compiler_params=pltpu.CompilerParams(
            dimension_semantics=("parallel",)),
    )(x_flat, tok_bf, tokT_bf, wac, wv_bf, consts, wp_col)

    return out_flat.reshape(B, E)


# ---------------------------------------------------------------------------
# Pure-JAX reference mirroring the PyTorch Head.forward semantics.
# ---------------------------------------------------------------------------
def head_reference(x, tok_emb, p):
    H = p['wk'].shape[0]
    k = tok_emb @ p['wk'].T + p['bk']                          # (V, H)
    q = x[..., None] * p['wq'] + p['bq']                       # (B, E, H)
    wei = jnp.einsum('beh,vh->bev', q, k) * (H ** -0.5)        # (B, E, V)
    wei = jax.nn.softmax(wei, axis=1)                          # dim=-2 (E)
    v = jnp.tanh(tok_emb @ p['wv'].T)                          # (V, H)
    out = jnp.tanh(jnp.einsum('bev,vh->beh', wei, v))          # (B, E, H)
    out = out @ p['wproj'].T + p['bproj']                      # (B, E, 1)
    return out[..., 0]                                         # squeeze


def init_params(key, E, H):
    ks = jax.random.split(key, 7)
    n = lambda k, shape, s=0.1: jax.random.normal(k, shape, jnp.float32) * s
    return {
        'wk': n(ks[0], (H, E)), 'bk': n(ks[1], (H,)),       # key: Linear(E, H)
        'wq': n(ks[2], (H,)),   'bq': n(ks[3], (H,)),       # query: Linear(1, H)
        'wv': n(ks[4], (H, E)),                             # value: Linear(E, H, bias=False)
        'wproj': n(ks[5], (1, H)), 'bproj': n(ks[6], (1,)), # proj: Linear(H, 1)
    }


if __name__ == "__main__":
    B, E, V, H = 2, 32, 16, 8   # batch, embdSize, tok_emb rows, headSize

    key = jax.random.PRNGKey(0)
    kx, kt, kp = jax.random.split(key, 3)
    x = jax.random.normal(kx, (B, E), jnp.float32)
    tok_emb = jax.random.normal(kt, (V, E), jnp.float32)
    params = init_params(kp, E, H)

    out = head_forward(x, tok_emb, params)
    out = jax.block_until_ready(out)

    ref = head_reference(x, tok_emb, params)
    assert out.shape == (B, E)
    err = float(jnp.max(jnp.abs(out - ref)))
    # bf16 MXU operands + approx reciprocal -> relaxed but tight-enough tolerance
    assert jnp.allclose(out, ref, atol=2e-2, rtol=2e-2), \
        f"mismatch vs reference (max abs err {err})"

    print("KERNEL_OK")
</pallas_src>

<mosaic_0001>
module attributes {stable_mosaic.version = 11 : i64} {
  func.func @head_fused_kernel(%arg0: i32, %arg1: memref<1x64xf32, #tpu.memory_space<vmem>>, %arg2: memref<16x32xbf16, #tpu.memory_space<vmem>>, %arg3: memref<32x16xbf16, #tpu.memory_space<vmem>>, %arg4: memref<2x32xf32, #tpu.memory_space<vmem>>, %arg5: memref<8x32xbf16, #tpu.memory_space<vmem>>, %arg6: memref<3xf32, #tpu.memory_space<smem>>, %arg7: memref<8x1xf32, #tpu.memory_space<vmem>>, %arg8: memref<1x64xf32, #tpu.memory_space<vmem>>, %arg9: memref<16x64xf32, #tpu.memory_space<vmem>>) attributes {dimension_semantics = [#tpu.dimension_semantics<parallel>], iteration_bounds = array<i64: 1>, scalar_prefetch = 0 : i64, scratch_operands = 1 : i64, tpu.core_type = #tpu.core_type<tc>, window_params = [{transform_indices = @transform_0, window_bounds = array<i64: 1, 64>}, {pipeline_mode = #tpu.pipeline_mode<synchronous>, transform_indices = @transform_1, window_bounds = array<i64: 16, 32>}, {pipeline_mode = #tpu.pipeline_mode<synchronous>, transform_indices = @transform_2, window_bounds = array<i64: 32, 16>}, {pipeline_mode = #tpu.pipeline_mode<synchronous>, transform_indices = @transform_3, window_bounds = array<i64: 2, 32>}, {pipeline_mode = #tpu.pipeline_mode<synchronous>, transform_indices = @transform_4, window_bounds = array<i64: 8, 32>}, {transform_indices = @transform_5, window_bounds = array<i64: 3>}, {pipeline_mode = #tpu.pipeline_mode<synchronous>, transform_indices = @transform_6, window_bounds = array<i64: 8, 1>}, {transform_indices = @transform_7, window_bounds = array<i64: 1, 64>}]} {
    %c0 = arith.constant 0 : index
    %0 = memref.load %arg6[%c0] : memref<3xf32, #tpu.memory_space<smem>>
    %c1 = arith.constant 1 : index
    %1 = memref.load %arg6[%c1] : memref<3xf32, #tpu.memory_space<smem>>
    %c2 = arith.constant 2 : index
    %2 = memref.load %arg6[%c2] : memref<3xf32, #tpu.memory_space<smem>>
    %c0_0 = arith.constant 0 : index
    %c0_1 = arith.constant 0 : index
    %3 = vector.load %arg2[%c0_0, %c0_1] : memref<16x32xbf16, #tpu.memory_space<vmem>>, vector<16x32xbf16>
    %4 = arith.extf %3 : vector<16x32xbf16> to vector<16x32xf32>
    %c0_2 = arith.constant 0 : index
    %c0_3 = arith.constant 0 : index
    %5 = vector.load %arg4[%c0_2, %c0_3] : memref<2x32xf32, #tpu.memory_space<vmem>>, vector<1x32xf32>
    %6 = vector.broadcast %5 : vector<1x32xf32> to vector<16x32xf32>
    %7 = arith.mulf %4, %6 : vector<16x32xf32>
    %cst = arith.constant dense<0.000000e+00> : vector<16xf32>
    %8 = vector.multi_reduction <add>, %7, %cst [1] : vector<16x32xf32> to vector<16xf32>
    %9 = vector.shape_cast %8 : vector<16xf32> to vector<16x1xf32>
    %10 = vector.broadcast %0 : f32 to vector<16x1xf32>
    %11 = arith.addf %9, %10 : vector<16x1xf32>
    %c1_4 = arith.constant 1 : index
    %c0_5 = arith.constant 0 : index
    %12 = vector.load %arg4[%c1_4, %c0_5] : memref<2x32xf32, #tpu.memory_space<vmem>>, vector<1x32xf32>
    %13 = vector.broadcast %12 : vector<1x32xf32> to vector<16x32xf32>
    %14 = arith.mulf %4, %13 : vector<16x32xf32>
    %cst_6 = arith.constant dense<0.000000e+00> : vector<16xf32>
    %15 = vector.multi_reduction <add>, %14, %cst_6 [1] : vector<16x32xf32> to vector<16xf32>
    %16 = vector.shape_cast %15 : vector<16xf32> to vector<16x1xf32>
    %17 = vector.broadcast %1 : f32 to vector<16x1xf32>
    %18 = arith.addf %16, %17 : vector<16x1xf32>
    %c0_7 = arith.constant 0 : index
    %c0_8 = arith.constant 0 : index
    %19 = vector.load %arg5[%c0_7, %c0_8] : memref<8x32xbf16, #tpu.memory_space<vmem>>, vector<8x32xbf16>
    %c0_9 = arith.constant 0 : index
    %c0_10 = arith.constant 0 : index
    %20 = vector.load %arg3[%c0_9, %c0_10] : memref<32x16xbf16, #tpu.memory_space<vmem>>, vector<32x16xbf16>
    %cst_11 = arith.constant dense<0.000000e+00> : vector<8x16xf32>
    %21 = tpu.matmul %19, %20, %cst_11 {dimension_numbers = #tpu.dot_dimension_numbers<[1], [0], [0], [1], [0, 0, 1, 1], [], []>} : vector<8x32xbf16>, vector<32x16xbf16>, vector<8x16xf32> -> vector<8x16xf32>
    %22 = math.tanh %21 : vector<8x16xf32>
    %c0_12 = arith.constant 0 : index
    %c0_13 = arith.constant 0 : index
    %23 = vector.load %arg1[%c0_12, %c0_13] : memref<1x64xf32, #tpu.memory_space<vmem>>, vector<1x32xf32>
    %24 = vector.broadcast %11 : vector<16x1xf32> to vector<16x32xf32>
    %25 = vector.broadcast %23 : vector<1x32xf32> to vector<16x32xf32>
    %26 = arith.mulf %24, %25 : vector<16x32xf32>
    %27 = vector.broadcast %18 : vector<16x1xf32> to vector<16x32xf32>
    %28 = arith.addf %26, %27 : vector<16x32xf32>
    %cst_14 = arith.constant dense<0xFF800000> : vector<16xf32>
    %29 = vector.multi_reduction <maximumf>, %28, %cst_14 [1] : vector<16x32xf32> to vector<16xf32>
    %30 = vector.shape_cast %29 : vector<16xf32> to vector<16x1xf32>
    %31 = vector.broadcast %30 : vector<16x1xf32> to vector<16x32xf32>
    %32 = arith.subf %28, %31 : vector<16x32xf32>
    %33 = math.exp %32 : vector<16x32xf32>
    %cst_15 = arith.constant dense<0.000000e+00> : vector<16xf32>
    %34 = vector.multi_reduction <add>, %33, %cst_15 [1] : vector<16x32xf32> to vector<16xf32>
    %35 = vector.shape_cast %34 : vector<16xf32> to vector<16x1xf32>
    %36 = tpu.reciprocal %35 {approx = true} : vector<16x1xf32> -> vector<16x1xf32>
    %37 = vector.broadcast %36 : vector<16x1xf32> to vector<16x32xf32>
    %38 = arith.mulf %33, %37 : vector<16x32xf32>
    %c0_16 = arith.constant 0 : index
    %c0_17 = arith.constant 0 : index
    %39 = vector.load %arg9[%c0_16, %c0_17] : memref<16x64xf32, #tpu.memory_space<vmem>>, vector<16x32xf32>
    tpu.vector_store %arg9[%c0_16, %c0_17], %38 {strides = array<i32>} : memref<16x64xf32, #tpu.memory_space<vmem>>, vector<16x32xf32>,
    %c0_18 = arith.constant 0 : index
    %c32 = arith.constant 32 : index
    %40 = vector.load %arg1[%c0_18, %c32] : memref<1x64xf32, #tpu.memory_space<vmem>>, vector<1x32xf32>
    %41 = vector.broadcast %11 : vector<16x1xf32> to vector<16x32xf32>
    %42 = vector.broadcast %40 : vector<1x32xf32> to vector<16x32xf32>
    %43 = arith.mulf %41, %42 : vector<16x32xf32>
    %44 = vector.broadcast %18 : vector<16x1xf32> to vector<16x32xf32>
    %45 = arith.addf %43, %44 : vector<16x32xf32>
    %cst_19 = arith.constant dense<0xFF800000> : vector<16xf32>
    %46 = vector.multi_reduction <maximumf>, %45, %cst_19 [1] : vector<16x32xf32> to vector<16xf32>
    %47 = vector.shape_cast %46 : vector<16xf32> to vector<16x1xf32>
    %48 = vector.broadcast %47 : vector<16x1xf32> to vector<16x32xf32>
    %49 = arith.subf %45, %48 : vector<16x32xf32>
    %50 = math.exp %49 : vector<16x32xf32>
    %cst_20 = arith.constant dense<0.000000e+00> : vector<16xf32>
    %51 = vector.multi_reduction <add>, %50, %cst_20 [1] : vector<16x32xf32> to vector<16xf32>
    %52 = vector.shape_cast %51 : vector<16xf32> to vector<16x1xf32>
    %53 = tpu.reciprocal %52 {approx = true} : vector<16x1xf32> -> vector<16x1xf32>
    %54 = vector.broadcast %53 : vector<16x1xf32> to vector<16x32xf32>
    %55 = arith.mulf %50, %54 : vector<16x32xf32>
    %c0_21 = arith.constant 0 : index
    %c32_22 = arith.constant 32 : index
    %56 = vector.load %arg9[%c0_21, %c32_22] : memref<16x64xf32, #tpu.memory_space<vmem>>, vector<16x32xf32>
    tpu.vector_store %arg9[%c0_21, %c32_22], %55 {strides = array<i32>} : memref<16x64xf32, #tpu.memory_space<vmem>>, vector<16x32xf32>,
    %57 = arith.truncf %22 : vector<8x16xf32> to vector<8x16xbf16>
    %c0_23 = arith.constant 0 : index
    %c0_24 = arith.constant 0 : index
    %58 = vector.load %arg9[%c0_23, %c0_24] : memref<16x64xf32, #tpu.memory_space<vmem>>, vector<16x64xf32>
    %59 = arith.truncf %58 : vector<16x64xf32> to vector<16x64xbf16>
    %cst_25 = arith.constant dense<0.000000e+00> : vector<8x64xf32>
    %60 = tpu.matmul %57, %59, %cst_25 {dimension_numbers = #tpu.dot_dimension_numbers<[1], [0], [0], [1], [0, 0, 1, 1], [], []>} : vector<8x16xbf16>, vector<16x64xbf16>, vector<8x64xf32> -> vector<8x64xf32>
    %61 = math.tanh %60 : vector<8x64xf32>
    %c0_26 = arith.constant 0 : index
    %c0_27 = arith.constant 0 : index
    %62 = vector.load %arg7[%c0_26, %c0_27] : memref<8x1xf32, #tpu.memory_space<vmem>>, vector<8x1xf32>
    %63 = vector.broadcast %62 : vector<8x1xf32> to vector<8x64xf32>
    %64 = arith.mulf %61, %63 : vector<8x64xf32>
    %cst_28 = arith.constant dense<0.000000e+00> : vector<64xf32>
    %65 = vector.multi_reduction <add>, %64, %cst_28 [0] : vector<8x64xf32> to vector<64xf32>
    %66 = vector.shape_cast %65 : vector<64xf32> to vector<1x64xf32>
    %67 = vector.broadcast %2 : f32 to vector<1x64xf32>
    %68 = arith.addf %66, %67 : vector<1x64xf32>
    %c0_29 = arith.constant 0 : index
    %c0_30 = arith.constant 0 : index
    %69 = vector.load %arg8[%c0_29, %c0_30] : memref<1x64xf32, #tpu.memory_space<vmem>>, vector<1x64xf32>
    tpu.vector_store %arg8[%c0_29, %c0_30], %68 {strides = array<i32>} : memref<1x64xf32, #tpu.memory_space<vmem>>, vector<1x64xf32>,
    return
  }
  func.func @transform_0(%arg0: i32) -> (i32, i32) {
    %c0_i32 = arith.constant 0 : i32
    %c0_i32_0 = arith.constant 0 : i32
    return %arg0, %c0_i32 : i32, i32
  }
  func.func @transform_1(%arg0: i32) -> (i32, i32) {
    %c0_i32 = arith.constant 0 : i32
    %c0_i32_0 = arith.constant 0 : i32
    %c0_i32_1 = arith.constant 0 : i32
    return %c0_i32, %c0_i32_0 : i32, i32
  }
  func.func @transform_2(%arg0: i32) -> (i32, i32) {
    %c0_i32 = arith.constant 0 : i32
    %c0_i32_0 = arith.constant 0 : i32
    %c0_i32_1 = arith.constant 0 : i32
    return %c0_i32, %c0_i32_0 : i32, i32
  }
  func.func @transform_3(%arg0: i32) -> (i32, i32) {
    %c0_i32 = arith.constant 0 : i32
    %c0_i32_0 = arith.constant 0 : i32
    %c0_i32_1 = arith.constant 0 : i32
    return %c0_i32, %c0_i32_0 : i32, i32
  }
  func.func @transform_4(%arg0: i32) -> (i32, i32) {
    %c0_i32 = arith.constant 0 : i32
    %c0_i32_0 = arith.constant 0 : i32
    %c0_i32_1 = arith.constant 0 : i32
    return %c0_i32, %c0_i32_0 : i32, i32
  }
  func.func @transform_5(%arg0: i32) -> i32 {
    %c0_i32 = arith.constant 0 : i32
    %c0_i32_0 = arith.constant 0 : i32
    return %c0_i32 : i32
  }
  func.func @transform_6(%arg0: i32) -> (i32, i32) {
    %c0_i32 = arith.constant 0 : i32
    %c0_i32_0 = arith.constant 0 : i32
    %c0_i32_1 = arith.constant 0 : i32
    return %c0_i32, %c0_i32_0 : i32, i32
  }
  func.func @transform_7(%arg0: i32) -> (i32, i32) {
    %c0_i32 = arith.constant 0 : i32
    %c0_i32_0 = arith.constant 0 : i32
    return %arg0, %c0_i32 : i32, i32
  }
}

</mosaic_0001>

<llo_original>
// kernel: tpu_custom_call.1
$region0: #{tpu_custom_call.1}
  #allocation0 [shape = 'u32[]', space=smem, size = 0x4, offset = 0x4, fixed_abs, tag = 'smem constant byte address 0x4 - core index']
  #allocation1 [shape = 'u32[144,128]{1,0:T(1,128)}', space=vmem, size = 0x12000, scoped, tag = 'internal scratch']
  #allocation2 [shape = 'f32[16,64]{1,0:T(8,128)}', space=vmem, size = 0x2000, scoped, tag = 'scratch operand']
  %s0 = inlined_call_operand.vmem [shape: f32[1,64], index: 0, kind: input, shape index: {}]
  %s1 = inlined_call_operand.vmem [shape: bf16[16,32], index: 1, kind: input, shape index: {}]
  %s2 = inlined_call_operand.vmem [shape: bf16[32,16], index: 2, kind: input, shape index: {}]
  %s3 = inlined_call_operand.vmem [shape: f32[2,32], index: 3, kind: input, shape index: {}]
  %s4 = inlined_call_operand.vmem [shape: bf16[8,32], index: 4, kind: input, shape index: {}]
  %s5 = inlined_call_operand.vmem [shape: f32[3], index: 5, kind: input, shape index: {}]
  %s6 = inlined_call_operand.vmem [shape: f32[8,1], index: 6, kind: input, shape index: {}]
  %s7 = inlined_call_operand.hbm [shape: f32[1,64], index: 7, kind: output, shape index: {}]
  %s8 = sld [smem:[#allocation0]]
  $region42: #{tpu_custom_call.1} parent=0
    _
  %s10 = ssub.s32 1, %s8
  %s11 = scalar_select 0, %s10, %s8
  $region1: #{tpu_custom_call.1} parent=0
    #allocation3 [shape = 'u8[512]{0}', space=smem, size = 0x200, scoped, tag = 'input window, operand 5, single buffered']
    #allocation4 [shape = 's32[1]{0}', space=sflag, size = 0x4, scoped, tag = 'scoped memory for tpu_custom_call.1']
    #allocation5 [shape = 's32[1]{0}', space=sflag, size = 0x4, scoped, tag = 'scoped memory for tpu_custom_call.1']
    #allocation6 [shape = 'u8[512]{0}', space=vmem, size = 0x400, scoped, tag = 'output window, operand 0, single buffered']
    %12 = vsyncpa [#allocation5], 0
    %13 = vsyncpa [#allocation4], 0
    // Predicated region
    $region2: #{tpu_custom_call.1} parent=1 // pred_check
      _
    $region3: #{tpu_custom_call.1} parent=1 // pred_check_branch
      %15 = sbr.rel (0) target = $region5
    $region4: #{tpu_custom_call.1} parent=1 // pred_region
      _
    $region5: #{tpu_custom_call.1} parent=1 // pred_fallthru
      _
    // Predicated region
    $region6: #{tpu_custom_call.1} parent=1 // pred_check
      _
    $region7: #{tpu_custom_call.1} parent=1 // pred_check_branch
      %17 = sbr.rel (0) target = $region9
    $region8: #{tpu_custom_call.1} parent=1 // pred_region
      _
    $region9: #{tpu_custom_call.1} parent=1 // pred_fallthru
      _
    // Predicated region
    $region10: #{tpu_custom_call.1} parent=1 // pred_check
      _
    $region11: #{tpu_custom_call.1} parent=1 // pred_check_branch
      %19 = sbr.rel (0) target = $region13
    $region12: #{tpu_custom_call.1} parent=1 // pred_region
      _
    $region13: #{tpu_custom_call.1} parent=1 // pred_fallthru
      _
    // Predicated region
    $region14: #{tpu_custom_call.1} parent=1 // pred_check
      _
    $region15: #{tpu_custom_call.1} parent=1 // pred_check_branch
      %21 = sbr.rel (0) target = $region17
    $region16: #{tpu_custom_call.1} parent=1 // pred_region
      _
    $region17: #{tpu_custom_call.1} parent=1 // pred_fallthru
      _
    // Predicated region
    $region18: #{tpu_custom_call.1} parent=1 // pred_check
      _
    $region19: #{tpu_custom_call.1} parent=1 // pred_check_branch
      %23 = sbr.rel (0) target = $region21
    $region20: #{tpu_custom_call.1} parent=1 // pred_region
      _
    $region21: #{tpu_custom_call.1} parent=1 // pred_fallthru
      _
    // Predicated region
    $region22: #{tpu_custom_call.1} parent=1 // pred_check
      _
    $region23: #{tpu_custom_call.1} parent=1 // pred_check_branch
      %25 = sbr.rel (0) target = $region25
    $region24: #{tpu_custom_call.1} parent=1 // pred_region
      %s27 = ssub.s32 16, 16
      %28 = vsyncadd [#allocation5], %s27
      %s30 = sshll.u32 %s5, 4
      %s31 = int_to_ptr.vmem [resolvable:$true] %s30
      %33 = dma.vmem_to_smem %s31, 16, [#allocation3], [#allocation5]
    $region25: #{tpu_custom_call.1} parent=1 // pred_fallthru
      _
    // Predicated region
    $region26: #{tpu_custom_call.1} parent=1 // pred_check
      _
    $region27: #{tpu_custom_call.1} parent=1 // pred_check_branch
      %35 = sbr.rel (0) target = $region29
    $region28: #{tpu_custom_call.1} parent=1 // pred_region
      _
    $region29: #{tpu_custom_call.1} parent=1 // pred_fallthru
      _
    // Predicated region
    $region30: #{tpu_custom_call.1} parent=1 // pred_check
      _
    $region31: #{tpu_custom_call.1} parent=1 // pred_check_branch
      %37 = sbr.rel (0) target = $region33
    $region32: #{tpu_custom_call.1} parent=1 // pred_region
      %38 = dma.done [#allocation5], 16
    $region33: #{tpu_custom_call.1} parent=1 // pred_fallthru
      _
    %39 = sfence
    %s41 = sld [smem:[#allocation3]]
    %s42 = sld [smem:[#allocation3 + $0x1]]
    %s43 = sld [smem:[#allocation3 + $0x2]]
    %v44 = vld [vmem:[%s1] sm:$0xf]
    %v45 = vld [vmem:[%s1 + $0x4] sm:$0xf]
    %v46 = vunpack.c.l.bf16 %v44
    %v47 = vunpack.c.l.bf16 %v45
    %v48 = vld [vmem:[%s3] sm:$0x1]
    %v49 = vlaneseq
    %v50 = vshrl.u32 %v49, 7
    %v51 = vsub.s32 0, %v50
    %v52 = vrot.slane %v48, %v51
    %v53 = vmul.f32 %v46, %v52
    %v54 = vmul.f32 %v47, %v52
    %vm55 = vcmask 261120
    %v56 = vsel %vm55, %v53, 0.0
    %57 = vadd.xlane.f32.xlu0 %v56
    %v58 = vpop.xlane.xlu0 %57
    %v59 = vsel %vm55, %v54, 0.0
    %60 = vadd.xlane.f32.xlu0 %v59
    %v61 = vpop.xlane.xlu0 %60
    %v62 = vstv %s41
    %v63 = vadd.f32 %v58, %v62
    %v64 = vadd.f32 %v61, %v62
    %v65 = vld [vmem:[%s3 + $0x1] sm:$0x1]
    %v66 = vlaneseq
    %v67 = vshrl.u32 %v66, 7
    %v68 = vsub.s32 0, %v67
    %v69 = vrot.slane %v65, %v68
    %v70 = vmul.f32 %v46, %v69
    %v71 = vmul.f32 %v47, %v69
    %v72 = vsel %vm55, %v70, 0.0
    %73 = vadd.xlane.f32.xlu0 %v72
    %v74 = vpop.xlane.xlu0 %73
    %v75 = vsel %vm55, %v71, 0.0
    %76 = vadd.xlane.f32.xlu0 %v75
    %v77 = vpop.xlane.xlu0 %76
    %v78 = vstv %s42
    %v79 = vadd.f32 %v74, %v78
    %v80 = vadd.f32 %v77, %v78
    %v81 = vld [vmem:[%s4] sm:$0xf]
    %v82 = vld [vmem:[%s2] sm:$0xf]
    %v83 = vld [vmem:[%s2 + $0x4] sm:$0xf]
    %v84 = vld [vmem:[%s2 + $0x8] sm:$0xf]
    %v85 = vld [vmem:[%s2 + $0xc] sm:$0xf]
    %v90 = vunpack.c.l.b16 %v82
    %v91 = vunpack.c.l.b16 %v83
    %v92 = vunpack.c.l.b16 %v84
    %v93 = vunpack.c.l.b16 %v85
    %v94 = vpack.c.b16 %v91, %v90
    %v95 = vpack.c.b16 %v93, %v92
    %v99 = vsel %vm55, %v81, 0
    %101 = vmatprep.subr.bf16.mxu0 0
    %102 = vmatpush1.bf16.msra.mxu0 0
    %103 = vmatprep.subr.bf16.mxu0 0
    %104 = vmatpush1.bf16.msra.mxu0 0
    %105 = vmatprep.subr.bf16.mxu0 0
    %106 = vmatpush1.bf16.msra.mxu0 0
    %107 = vmatprep.subr.bf16.mxu0 0
    %108 = vmatpush1.bf16.msra.mxu0 0
    %109 = vmatprep.subr.bf16.mxu0 0
    %110 = vmatpush1.bf16.msra.mxu0 0
    %111 = vmatprep.subr.bf16.mxu0 0
    %112 = vmatpush1.bf16.msra.mxu0 0
    %113 = vmatprep.subr.bf16.mxu0 0
    %114 = vmatpush1.bf16.msra.mxu0 %v95
    %115 = vmatprep.subr.bf16.mxu0 0
    %116 = vmatpush1.bf16.msra.mxu0 %v94
    %117 = vmatprep.subr.bf16.mxu0 0
    %118 = vmatpush2.bf16.msra.mxu0 0
    %119 = vmatprep.subr.bf16.mxu0 0
    %120 = vmatpush2.bf16.msra.mxu0 0
    %121 = vmatprep.subr.bf16.mxu0 0
    %122 = vmatpush2.bf16.msra.mxu0 0
    %123 = vmatprep.subr.bf16.mxu0 0
    %124 = vmatpush2.bf16.msra.mxu0 0
    %125 = vmatprep.subr.bf16.mxu0 0
    %126 = vmatpush2.bf16.msra.mxu0 0
    %127 = vmatprep.subr.bf16.mxu0 0
    %128 = vmatpush2.bf16.msra.mxu0 0
    %129 = vmatprep.subr.bf16.mxu0 0
    %130 = vmatpush2.bf16.msra.mxu0 0
    %131 = vmatprep.subr.bf16.mxu0 0
    %132 = vmatpush2.bf16.msra.mxu0 0
    %133 = vmatprep.mubr.bf16.mxu0 0
    %134 = vmatmul.mubr.bf16.gmra.mxu0 %v99
    %v135 = vpop.f32.mrf.mxu0
    %v136 = vadd.f32 0.0, %v135
    %v137 = vpop.f32.mrf.mxu0
    %v138 = vpop.f32.mrf.mxu0
    %v139 = vpop.f32.mrf.mxu0
    %140 = vdwg.mxu0
    %v141 = vtanh.pop %v136
    %v142 = vld [vmem:[%s0] sm:$0x1]
    %v144 = vlaneseq
    %v145 = vshrl.u32 %v144, 7
    %v146 = vsub.s32 0, %v145
    %v147 = vrot.slane %v142, %v146
    %v149 = vmul.f32 %v63, %v147
    %v150 = vmul.f32 %v64, %v147
    %v151 = vadd.f32 %v149, %v79
    %v152 = vadd.f32 %v150, %v80
    %v153 = vsel %vm55, %v151, -inf
    %154 = vmax.xlane.f32.xlu0 %v153
    %v155 = vpop.xlane.xlu0 %154
    %v156 = vsel %vm55, %v152, -inf
    %157 = vmax.xlane.f32.xlu0 %v156
    %v158 = vpop.xlane.xlu0 %157
    %v159 = vsub.f32 %v151, %v155
    %v160 = vsub.f32 %v152, %v158
    %v161 = vmul.f32 %v159, 1.442695
    %v162 = vpow.pop %v161
    %v163 = vmul.f32 %v160, 1.442695
    %v164 = vpow.pop %v163
    %v165 = vsel %vm55, %v162, 0.0
    %166 = vadd.xlane.f32.xlu0 %v165
    %v167 = vpop.xlane.xlu0 %166
    %v168 = vsel %vm55, %v164, 0.0
    %169 = vadd.xlane.f32.xlu0 %v168
    %v170 = vpop.xlane.xlu0 %169
    %v171 = vrcp.pop %v167
    %v172 = vrcp.pop %v170
    %v173 = vmul.f32 %v162, %v171
    %v174 = vmul.f32 %v164, %v172
    %175 = vst.msk [vmem:[#allocation2] sm:$0xff] %vm55, %v173
    %176 = vst.msk [vmem:[#allocation2 + $0x8] sm:$0xff] %vm55, %v174
    %v177 = vld [vmem:[%s0] sm:$0x1]
    %v179 = vlaneseq
    %v180 = vshrl.u32 %v179, 7
    %v181 = vsub.s32 0, %v180
    %v182 = vrot.slane %v177, %v181
    %v184 = vmul.f32 %v63, %v182
    %v185 = vmul.f32 %v64, %v182
    %v186 = vadd.f32 %v184, %v79
    %v187 = vadd.f32 %v185, %v80
    %vm188 = vcmask 523520
    %v189 = vsel %vm188, %v186, -inf
    %190 = vmax.xlane.f32.xlu0 %v189
    %v191 = vpop.xlane.xlu0 %190
    %v192 = vsel %vm188, %v187, -inf
    %193 = vmax.xlane.f32.xlu0 %v192
    %v194 = vpop.xlane.xlu0 %193
    %v195 = vsub.f32 %v186, %v191
    %v196 = vsub.f32 %v187, %v194
    %v197 = vmul.f32 %v195, 1.442695
    %v198 = vpow.pop %v197
    %v199 = vmul.f32 %v196, 1.442695
    %v200 = vpow.pop %v199
    %203 = vrot.lane.b32.xlu0 %v198, 96
    %v204 = vpop.permute.xlu0 %203
    %205 = vrot.lane.b32.xlu0 %v200, 96
    %v206 = vpop.permute.xlu0 %205
    %v209 = vsel %vm55, %v204, 0.0
    %210 = vadd.xlane.f32.xlu0 %v209
    %v211 = vpop.xlane.xlu0 %210
    %v212 = vsel %vm55, %v206, 0.0
    %213 = vadd.xlane.f32.xlu0 %v212
    %v214 = vpop.xlane.xlu0 %213
    %v215 = vrcp.pop %v211
    %v216 = vrcp.pop %v214
    %v217 = vmul.f32 %v198, %v215
    %v218 = vmul.f32 %v200, %v216
    %219 = vst.msk [vmem:[#allocation2] sm:$0xff] %vm188, %v217
    %220 = vst.msk [vmem:[#allocation2 + $0x8] sm:$0xff] %vm188, %v218
    %v221 = vpack.c.bf16 %v141, %v141
    %v222 = vld [vmem:[#allocation2] sm:$0xff]
    %v223 = vld [vmem:[#allocation2 + $0x8] sm:$0xff]
    %v224 = vpack.c.bf16 %v223, %v222
    %vm225 = vcmask 130048
    %v227 = vsel %vm225, %v221, 0
    %229 = vmatprep.subr.bf16.mxu0 0
    %230 = vmatpush1.bf16.msra.mxu0 0
    %231 = vmatprep.subr.bf16.mxu0 0
    %232 = vmatpush1.bf16.msra.mxu0 0
    %233 = vmatprep.subr.bf16.mxu0 0
    %234 = vmatpush1.bf16.msra.mxu0 0
    %235 = vmatprep.subr.bf16.mxu0 0
    %236 = vmatpush1.bf16.msra.mxu0 0
    %237 = vmatprep.subr.bf16.mxu0 0
    %238 = vmatpush1.bf16.msra.mxu0 0
    %239 = vmatprep.subr.bf16.mxu0 0
    %240 = vmatpush1.bf16.msra.mxu0 0
    %241 = vmatprep.subr.bf16.mxu0 0
    %242 = vmatpush1.bf16.msra.mxu0 0
    %243 = vmatprep.subr.bf16.mxu0 0
    %244 = vmatpush1.bf16.msra.mxu0 %v224
    %245 = vmatprep.subr.bf16.mxu0 0
    %246 = vmatpush2.bf16.msra.mxu0 0
    %247 = vmatprep.subr.bf16.mxu0 0
    %248 = vmatpush2.bf16.msra.mxu0 0
    %249 = vmatprep.subr.bf16.mxu0 0
    %250 = vmatpush2.bf16.msra.mxu0 0
    %251 = vmatprep.subr.bf16.mxu0 0
    %252 = vmatpush2.bf16.msra.mxu0 0
    %253 = vmatprep.subr.bf16.mxu0 0
    %254 = vmatpush2.bf16.msra.mxu0 0
    %255 = vmatprep.subr.bf16.mxu0 0
    %256 = vmatpush2.bf16.msra.mxu0 0
    %257 = vmatprep.subr.bf16.mxu0 0
    %258 = vmatpush2.bf16.msra.mxu0 0
    %259 = vmatprep.subr.bf16.mxu0 0
    %260 = vmatpush2.bf16.msra.mxu0 0
    %261 = vmatprep.mubr.bf16.mxu0 0
    %262 = vmatmul.mubr.bf16.gmra.mxu0 %v227
    %v263 = vpop.f32.mrf.mxu0
    %v264 = vadd.f32 0.0, %v263
    %v265 = vpop.f32.mrf.mxu0
    %v266 = vpop.f32.mrf.mxu0
    %v267 = vpop.f32.mrf.mxu0
    %268 = vdwg.mxu0
    %v269 = vtanh.pop %v264
    %v270 = vld [vmem:[%s6] sm:$0xff]
    %272 = vset.pattern.permute.xlu0 0
    %273 = vperm.xlu0 %272, %v270
    %v274 = vpop.permute.xlu0 %273
    %v276 = vmul.f32 %v269, %v274
    %vm277 = vcmask 523264
    %v278 = vsel %vm277, %v276, 0.0
    %v279 = vrot.slane %v278, 4
    %v280 = vadd.f32 %v278, %v279
    %v281 = vrot.slane %v280, 2
    %v282 = vadd.f32 %v280, %v281
    %v283 = vrot.slane %v282, 1
    %v284 = vadd.f32 %v282, %v283
    %v285 = vstv %s43
    %v286 = vadd.f32 %v284, %v285
    %vm287 = vcmask 516096
    %288 = vst.msk [vmem:[#allocation6] sm:$0x1] %vm287, %v286
    // Predicated region
    $region34: #{tpu_custom_call.1} parent=1 // pred_check
      _
    $region35: #{tpu_custom_call.1} parent=1 // pred_check_branch
      %290 = sbr.rel (0) target = $region37
    $region36: #{tpu_custom_call.1} parent=1 // pred_region
      %s292 = ssub.s32 16, 16
      %293 = vsyncadd [#allocation4], %s292
      %s295 = sshll.u32 [#allocation6], 4
      %s296 = int_to_ptr.vmem [resolvable:$true] %s295
      %298 = dma.vmem_to_hbm [thread:$0]  %s296, 16, %s7, [#allocation4]
    $region37: #{tpu_custom_call.1} parent=1 // pred_fallthru
      _
    // Predicated region
    $region38: #{tpu_custom_call.1} parent=1 // pred_check
      _
    $region39: #{tpu_custom_call.1} parent=1 // pred_check_branch
      %300 = sbr.rel (0) target = $region41
    $region40: #{tpu_custom_call.1} parent=1 // pred_region
      %301 = dma.done [#allocation4], 16
    $region41: #{tpu_custom_call.1} parent=1 // pred_fallthru
      _
    %302 = vsyncpa [#allocation4], 1
    %303 = vsyncpa [#allocation5], 1

</llo_original>
